<compile_context>
chip_gen: v5e
topology: v5e:2x2
jax: 0.10.0
libtpu: 0.0.40
codegen_flags: <defaults>
</compile_context>

<pallas_src>
import jax
import jax.numpy as jnp
from jax.experimental import pallas as pl
from jax.experimental.pallas import tpu as pltpu

BN_EPS = 1e-5


def _conv_bn_double_kernel(x_ref, p_ref, o_ref):
    # x_ref: (Cin, R)      input pixels: channels on sublanes, pixels on lanes
    # p_ref: (Cout, Cin+3) packed params: [:, :Cin]=W, [:, Cin]=conv bias,
    #                      [:, Cin+1]=2*gamma, [:, Cin+2]=2*beta
    # o_ref: (Cout, R)
    cin = x_ref.shape[0]
    r = x_ref.shape[1]
    inv_r = 1.0 / float(r)

    x = x_ref[...].astype(jnp.float32)
    p = p_ref[...].astype(jnp.float32)

    w = p[:, :cin]                      # (Cout, Cin)
    b = p[:, cin:cin + 1]               # (Cout, 1)  conv bias
    g2 = p[:, cin + 1:cin + 2]          # (Cout, 1)  2*gamma (doubling folded in)
    b2 = p[:, cin + 2:cin + 3]          # (Cout, 1)  2*beta

    # --- 1x1 conv: single MXU matmul + bias ---
    y = jnp.dot(w, x, preferred_element_type=jnp.float32) + b   # (Cout, R)

    # --- BatchNorm2d (training mode, biased batch variance), two-pass stats ---
    mean = jnp.sum(y, axis=1, keepdims=True) * inv_r
    yc = y - mean
    var = jnp.sum(yc * yc, axis=1, keepdims=True) * inv_r
    inv_std = jax.lax.rsqrt(var + BN_EPS)

    # out = (y - mean) * inv_std * (2*gamma) + (2*beta)   (s2 + s2 folded into affine)
    o_ref[...] = (yc * (inv_std * g2) + b2).astype(o_ref.dtype)


def pack_params(conv_w, conv_b, bn_gamma, bn_beta):
    """One-time, outside the per-call jitted path: pack all params into one tile."""
    C = conv_b.shape[0]
    w_mat = conv_w.reshape(C, C).astype(jnp.float32)         # (Cout, Cin)
    return jnp.concatenate(
        [w_mat,
         conv_b.reshape(C, 1).astype(jnp.float32),
         (2.0 * bn_gamma).reshape(C, 1).astype(jnp.float32),
         (2.0 * bn_beta).reshape(C, 1).astype(jnp.float32)],
        axis=1,
    )                                                         # (C, C+3)


def _forward_impl(x_nchw, params):
    N, C, H, W = x_nchw.shape
    R = N * H * W

    # (C, R) layout: transpose-free for N == 1 (the module's case).
    if N == 1:
        x_cr = x_nchw.reshape(C, H * W)
    else:
        x_cr = jnp.transpose(x_nchw, (1, 0, 2, 3)).reshape(C, R)

    vmem = pl.BlockSpec(memory_space=pltpu.MemorySpace.VMEM)

    out_cr = pl.pallas_call(
        _conv_bn_double_kernel,
        out_shape=jax.ShapeDtypeStruct((C, R), x_nchw.dtype),
        in_specs=[vmem, vmem],
        out_specs=vmem,
    )(x_cr, params)

    if N == 1:
        return out_cr.reshape(1, C, H, W)
    return jnp.transpose(out_cr.reshape(C, N, H, W), (1, 0, 2, 3))


model_forward = jax.jit(_forward_impl)


if __name__ == "__main__":
    key = jax.random.PRNGKey(0)
    k_x, k_w, k_b = jax.random.split(key, 3)

    N, C, H, W = 1, 6, 6, 6
    x2 = jax.random.normal(k_x, (N, C, H, W), dtype=jnp.float32)

    # Deterministic parameter init (same shapes as the torch module).
    fan_in = C * 1 * 1
    bound = 1.0 / (fan_in ** 0.5)
    conv_w = jax.random.uniform(k_w, (C, C, 1, 1), minval=-bound, maxval=bound,
                                dtype=jnp.float32)
    conv_b = jax.random.uniform(k_b, (C,), minval=-bound, maxval=bound,
                                dtype=jnp.float32)
    bn_gamma = jnp.ones((C,), dtype=jnp.float32)   # BatchNorm2d default init
    bn_beta = jnp.zeros((C,), dtype=jnp.float32)

    # One-time parameter packing, hoisted out of the per-call path.
    params = jax.block_until_ready(pack_params(conv_w, conv_b, bn_gamma, bn_beta))

    out = model_forward(x2, params)
    jax.block_until_ready(out)

    # Pure-JAX reference (training-mode BN with biased batch statistics).
    y_ref = jnp.einsum('nchw,oc->nohw', x2, conv_w.reshape(C, C)) \
            + conv_b.reshape(1, C, 1, 1)
    mean = jnp.mean(y_ref, axis=(0, 2, 3), keepdims=True)
    var = jnp.mean((y_ref - mean) ** 2, axis=(0, 2, 3), keepdims=True)
    s2_ref = (y_ref - mean) * jax.lax.rsqrt(var + BN_EPS) \
             * bn_gamma.reshape(1, C, 1, 1) + bn_beta.reshape(1, C, 1, 1)
    ref = s2_ref + s2_ref
    assert jnp.allclose(out, ref, atol=1e-4, rtol=1e-4), "mismatch vs reference"

    # TODO(synk): the original torch forward() has no return statement (returns
    # None); we return the computed `s2 + s2` value instead.
    print("KERNEL_OK")
</pallas_src>

<mosaic_0001>
module attributes {stable_mosaic.version = 11 : i64} {
  func.func @_conv_bn_double_kernel(%arg0: memref<6x36xf32, #tpu.memory_space<vmem>>, %arg1: memref<6x9xf32, #tpu.memory_space<vmem>>, %arg2: memref<6x36xf32, #tpu.memory_space<vmem>>) attributes {dimension_semantics = [], scalar_prefetch = 0 : i64, scratch_operands = 0 : i64, tpu.core_type = #tpu.core_type<tc>} {
    %c0 = arith.constant 0 : index
    %c0_0 = arith.constant 0 : index
    %0 = vector.load %arg0[%c0, %c0_0] : memref<6x36xf32, #tpu.memory_space<vmem>>, vector<6x36xf32>
    %c0_1 = arith.constant 0 : index
    %c0_2 = arith.constant 0 : index
    %1 = vector.load %arg1[%c0_1, %c0_2] : memref<6x9xf32, #tpu.memory_space<vmem>>, vector<6x9xf32>
    %2 = vector.extract_strided_slice %1 {offsets = [0, 0], sizes = [6, 6], strides = [1, 1]} : vector<6x9xf32> to vector<6x6xf32>
    %3 = vector.extract_strided_slice %1 {offsets = [0, 6], sizes = [6, 1], strides = [1, 1]} : vector<6x9xf32> to vector<6x1xf32>
    %4 = vector.extract_strided_slice %1 {offsets = [0, 7], sizes = [6, 1], strides = [1, 1]} : vector<6x9xf32> to vector<6x1xf32>
    %5 = vector.extract_strided_slice %1 {offsets = [0, 8], sizes = [6, 1], strides = [1, 1]} : vector<6x9xf32> to vector<6x1xf32>
    %cst = arith.constant dense<0.000000e+00> : vector<6x36xf32>
    %6 = tpu.matmul %2, %0, %cst {dimension_numbers = #tpu.dot_dimension_numbers<[1], [0], [0], [1], [0, 0, 1, 1], [], []>} : vector<6x6xf32>, vector<6x36xf32>, vector<6x36xf32> -> vector<6x36xf32>
    %7 = vector.broadcast %3 : vector<6x1xf32> to vector<6x36xf32>
    %8 = arith.addf %6, %7 : vector<6x36xf32>
    %cst_3 = arith.constant dense<0.000000e+00> : vector<6xf32>
    %9 = vector.multi_reduction <add>, %8, %cst_3 [1] : vector<6x36xf32> to vector<6xf32>
    %10 = vector.shape_cast %9 : vector<6xf32> to vector<6x1xf32>
    %cst_4 = arith.constant 0.027777778 : f32
    %11 = vector.broadcast %cst_4 : f32 to vector<6x1xf32>
    %12 = arith.mulf %10, %11 : vector<6x1xf32>
    %13 = vector.broadcast %12 : vector<6x1xf32> to vector<6x36xf32>
    %14 = arith.subf %8, %13 : vector<6x36xf32>
    %15 = arith.mulf %14, %14 : vector<6x36xf32>
    %cst_5 = arith.constant dense<0.000000e+00> : vector<6xf32>
    %16 = vector.multi_reduction <add>, %15, %cst_5 [1] : vector<6x36xf32> to vector<6xf32>
    %17 = vector.shape_cast %16 : vector<6xf32> to vector<6x1xf32>
    %cst_6 = arith.constant 0.027777778 : f32
    %18 = vector.broadcast %cst_6 : f32 to vector<6x1xf32>
    %19 = arith.mulf %17, %18 : vector<6x1xf32>
    %cst_7 = arith.constant 9.99999974E-6 : f32
    %20 = vector.broadcast %cst_7 : f32 to vector<6x1xf32>
    %21 = arith.addf %19, %20 : vector<6x1xf32>
    %22 = math.rsqrt %21 : vector<6x1xf32>
    %23 = arith.mulf %22, %4 : vector<6x1xf32>
    %24 = vector.broadcast %23 : vector<6x1xf32> to vector<6x36xf32>
    %25 = arith.mulf %14, %24 : vector<6x36xf32>
    %26 = vector.broadcast %5 : vector<6x1xf32> to vector<6x36xf32>
    %27 = arith.addf %25, %26 : vector<6x36xf32>
    %c0_8 = arith.constant 0 : index
    %c0_9 = arith.constant 0 : index
    %28 = vector.load %arg2[%c0_8, %c0_9] : memref<6x36xf32, #tpu.memory_space<vmem>>, vector<6x36xf32>
    tpu.vector_store %arg2[%c0_8, %c0_9], %27 {strides = array<i32>} : memref<6x36xf32, #tpu.memory_space<vmem>>, vector<6x36xf32>,
    return
  }
}

</mosaic_0001>

<llo_original>
// kernel: _forward_impl.1
$region0: #{_forward_impl.1}
  #allocation0 [shape = 'u32[]', space=smem, size = 0x4, offset = 0x4, fixed_abs, tag = 'smem constant byte address 0x4 - core index']
  #allocation1 [shape = 'u32[72,128]{1,0:T(1,128)}', space=vmem, size = 0x9000, scoped, tag = 'internal scratch']
  %s0 = inlined_call_operand.vmem [shape: f32[6,36], index: 0, kind: input, shape index: {}]
  %s1 = inlined_call_operand.vmem [shape: f32[6,9], index: 1, kind: input, shape index: {}]
  %s2 = inlined_call_operand.vmem [shape: f32[6,36], index: 2, kind: output, shape index: {}]
  %s3 = sld [smem:[#allocation0]]
  $region18: #{_forward_impl.1} parent=0
    _
  %s5 = ssub.s32 1, %s3
  %s6 = scalar_select 0, %s5, %s3
  // Predicated region
  $region2: #{_forward_impl.1} parent=0 // pred_check
    _
  $region3: #{_forward_impl.1} parent=0 // pred_check_branch
    %8 = sbr.rel (0) target = $region5
  $region4: #{_forward_impl.1} parent=0 // pred_region
    _
  $region5: #{_forward_impl.1} parent=0 // pred_fallthru
    _
  // Predicated region
  $region6: #{_forward_impl.1} parent=0 // pred_check
    _
  $region7: #{_forward_impl.1} parent=0 // pred_check_branch
    %10 = sbr.rel (0) target = $region9
  $region8: #{_forward_impl.1} parent=0 // pred_region
    _
  $region9: #{_forward_impl.1} parent=0 // pred_fallthru
    _
  %v11 = vld [vmem:[%s0] sm:$0x3f]
  %v12 = vld [vmem:[%s1] sm:$0x3f]
  %14 = vset.pattern.permute.xlu0 6
  %15 = vperm.xlu0 %14, %v12
  %v16 = vpop.permute.xlu0 %15
  %vm18 = vcmask 48128
  %v19 = vsel %vm18, %v12, 0
  %vm21 = vcmask 1045504
  %v23 = vsel %vm21, %v11, 0
  %25 = vmatpush.msra.mxu0 0.0
  %26 = vmatpush.msra.mxu0 0.0
  %27 = vmatpush.msra.mxu0 0.0
  %28 = vmatpush.msra.mxu0 0.0
  %29 = vmatpush.msra.mxu0 0.0
  %30 = vmatpush.msra.mxu0 0.0
  %31 = vmatpush.msra.mxu0 0.0
  %32 = vmatpush.msra.mxu0 0.0
  %33 = vmatpush.msra.mxu0 0.0
  %34 = vmatpush.msra.mxu0 0.0
  %35 = vmatpush.msra.mxu0 0.0
  %36 = vmatpush.msra.mxu0 0.0
  %37 = vmatpush.msra.mxu0 0.0
  %38 = vmatpush.msra.mxu0 0.0
  %39 = vmatpush.msra.mxu0 0.0
  %40 = vmatpush.msra.mxu0 %v23
  %41 = vmatmul.f32.gmra.mxu0 %v19
  %v42 = vpop.f32.mrf.mxu0
  %v43 = vadd.f32 %v16, %v42
  %44 = vdwg.mxu0
  %vm45 = vcmask 291840
  %v46 = vsel %vm45, %v43, 0.0
  %47 = vadd.xlane.f32.xlu0 %v46
  %v48 = vpop.xlane.xlu0 %47
  %v49 = vmul.f32 %v48, 0.027777778
  %v50 = vsub.f32 %v43, %v49
  %v51 = vmul.f32 %v50, %v50
  %v52 = vsel %vm45, %v51, 0.0
  %53 = vadd.xlane.f32.xlu0 %v52
  %v54 = vpop.xlane.xlu0 %53
  %v55 = vmul.f32 %v54, 0.027777778
  %v56 = vadd.f32 %v55, 1e-05
  %v57 = vrsqrt.pop %v56
  %v58 = vmul.f32 %v57, %v56
  %v59 = vmul.f32 %v58, %v57
  %v60 = vmul.f32 0.5, %v59
  %v61 = vsub.f32 1.5, %v60
  %v62 = vmul.f32 %v57, %v61
  %vm63 = vweird.f32 %v56
  %vm64 = vweird.f32 %v57
  %vm65 = vmor %vm63, %vm64
  %v66 = vsel %vm65, %v57, %v62
  %v67 = vmul.f32 %v66, %v12
  %69 = vset.pattern.permute.xlu0 7
  %70 = vperm.xlu0 %69, %v67
  %v71 = vpop.permute.xlu0 %70
  %v73 = vmul.f32 %v50, %v71
  %74 = vset.pattern.permute.xlu0 8
  %75 = vperm.xlu0 %74, %v12
  %v76 = vpop.permute.xlu0 %75
  %v78 = vadd.f32 %v73, %v76
  %79 = vst.msk [vmem:[%s2] sm:$0x3f] %vm45, %v78
  // Predicated region
  $region10: #{_forward_impl.1} parent=0 // pred_check
    _
  $region11: #{_forward_impl.1} parent=0 // pred_check_branch
    %81 = sbr.rel (0) target = $region13
  $region12: #{_forward_impl.1} parent=0 // pred_region
    _
  $region13: #{_forward_impl.1} parent=0 // pred_fallthru
    _
  // Predicated region
  $region14: #{_forward_impl.1} parent=0 // pred_check
    _
  $region15: #{_forward_impl.1} parent=0 // pred_check_branch
    %83 = sbr.rel (0) target = $region17
  $region16: #{_forward_impl.1} parent=0 // pred_region
    _
  $region17: #{_forward_impl.1} parent=0 // pred_fallthru
    _

</llo_original>
